<compile_context>
chip_gen: v7x
topology: tpu7x:2x2x1
jax: 0.10.0
libtpu: 0.0.40
codegen_flags: <defaults>
</compile_context>

<pallas_src>
import collections

import jax
import jax.numpy as jnp
import numpy as np
from jax.experimental import pallas as pl
from jax.experimental.pallas import tpu as pltpu

_LANES = 128
_SUBLANES = 8
_VMEM_LIMIT_BYTES = 32 * 1024 * 1024      # safe on v5e / v6e / v7x
_VMEM_BUDGET_BYTES = 24 * 1024 * 1024     # headroom under the limit for tile sizing
_MAX_TILE_ROWS = 2048
_PALLAS_MIN_ELEMS = 1 << 17               # below this, plain jnp is cheaper than a launch


def _ceil_div(a, b):
    return -(-a // b)


def _round_up(a, b):
    return _ceil_div(a, b) * b


# ----------------------------------------------------------------------------
# Kernel
# ----------------------------------------------------------------------------
def _make_poly_kernel(degree: int, base: float):
    """Horner-evaluation kernel for a fixed (static) degree >= 2 and base factor."""

    def kernel(fac_ref, t_ref, out_ref):
        # x = poly_base_factor * t; shape (tile_r, 128).  Skip the mul when base == 1.
        x = t_ref[...] if base == 1.0 else base * t_ref[...]
        # Horner: c0 + x*(c1 + x*(c2 + ...)); statically unrolled (degree is small).
        # Horner at x == 0 yields c0, matching pow(0, 0) == 1 semantics.
        acc = fac_ref[degree - 1]                     # (tile_r, 128)
        for f in range(degree - 2, -1, -1):
            acc = acc * x + fac_ref[f]
        out_ref[...] = acc

    return kernel


# ----------------------------------------------------------------------------
# Tiling & prepared (cached) factor layout
# ----------------------------------------------------------------------------
def _choose_tiling(rows: int, deg: int):
    """Pick (tile_r, rows_padded, num_tiles) for a lane-dense (rows, 128) problem."""
    # Double-buffered VMEM footprint per row: deg factor slabs + t + out, f32, 128 lanes.
    per_row_bytes = (deg + 2) * _LANES * 4 * 2
    cap = (_VMEM_BUDGET_BYTES // per_row_bytes) // _SUBLANES * _SUBLANES
    cap = max(_SUBLANES, min(_MAX_TILE_ROWS, cap))
    # At least two grid steps whenever there is enough work (v7x megacore sharding).
    min_tiles = 2 if rows >= 2 * _SUBLANES else 1
    num_tiles = max(min_tiles, _ceil_div(rows, cap))
    tile_r = _round_up(_ceil_div(rows, num_tiles), _SUBLANES)   # balanced, multiple of 8
    rows_padded = num_tiles * tile_r
    return tile_r, rows_padded, num_tiles


PreparedFactors = collections.namedtuple(
    "PreparedFactors", ["fac", "P", "D", "deg", "n", "rows_padded", "tile_r", "num_tiles"])


def prepare_factors(factors, degree):
    """Re-layout factors (P, F, D) -> (deg, rows_padded, 128) once; cache across calls.

    The returned object can be passed to `polynomial_forward(..., prepared=...)` so the
    per-timestep call only streams the cached layout (no per-call transpose/pad pass).
    """
    factors = jnp.asarray(factors, jnp.float32)
    P, F, D = factors.shape
    deg = max(0, min(int(degree), F))
    n = P * D
    if deg == 0:
        return PreparedFactors(None, P, D, 0, n, 0, 0, 0)
    if deg == 1:
        # out == c0; no kernel needed.
        return PreparedFactors(factors[:, 0, :], P, D, 1, n, 0, 0, 0)

    rows = _ceil_div(n, _LANES)
    tile_r, rows_padded, num_tiles = _choose_tiling(rows, deg)
    # (P, deg, D) -> (deg, P, D) -> (deg, P*D) -> zero-pad -> (deg, rows_padded, 128)
    fac = jnp.transpose(factors[:, :deg, :], (1, 0, 2)).reshape(deg, n)
    fac = jnp.pad(fac, ((0, 0), (0, rows_padded * _LANES - n)))
    fac = fac.reshape(deg, rows_padded, _LANES)
    return PreparedFactors(fac, P, D, deg, n, rows_padded, tile_r, num_tiles)


# ----------------------------------------------------------------------------
# Forward
# ----------------------------------------------------------------------------
def _forward_jnp(factors, timestamp, deg, base):
    """Tiny-problem fallback: one small XLA elementwise fusion, no Pallas launch."""
    x = (jnp.float32(base) * timestamp.reshape(-1)).reshape(-1, 1)   # (P, 1)
    acc = factors[:, deg - 1, :]
    for f in range(deg - 2, -1, -1):
        acc = acc * x + factors[:, f, :]
    return acc.astype(jnp.float32)


def _forward_pallas(prep: PreparedFactors, timestamp, base):
    if prep.deg == 0:
        return jnp.zeros((prep.P, prep.D), jnp.float32)
    if prep.deg == 1:
        return prep.fac                                              # c0, already (P, D)

    n_pad = prep.rows_padded * _LANES
    # Timestamp broadcast across D (layout plumbing, one small fused pass) -> (rows, 128).
    t = jnp.broadcast_to(timestamp.reshape(prep.P, 1), (prep.P, prep.D)).reshape(prep.n)
    t = jnp.pad(t, (0, n_pad - prep.n)).reshape(prep.rows_padded, _LANES)

    out_flat = pl.pallas_call(
        _make_poly_kernel(prep.deg, float(base)),
        out_shape=jax.ShapeDtypeStruct((prep.rows_padded, _LANES), jnp.float32),
        grid_spec=pltpu.PrefetchScalarGridSpec(
            num_scalar_prefetch=0,
            grid=(prep.num_tiles,),
            in_specs=[
                pl.BlockSpec((prep.deg, prep.tile_r, _LANES), lambda i: (0, i, 0)),
                pl.BlockSpec((prep.tile_r, _LANES), lambda i: (i, 0)),
            ],
            out_specs=pl.BlockSpec((prep.tile_r, _LANES), lambda i: (i, 0)),
        ),
        compiler_params=pltpu.CompilerParams(
            dimension_semantics=("parallel",),
            vmem_limit_bytes=_VMEM_LIMIT_BYTES),
    )(prep.fac, t)

    out = out_flat.reshape(n_pad)
    if n_pad != prep.n:
        out = out[:prep.n]   # slice copy only when P*D is not lane-aligned
    return out.reshape(prep.P, prep.D)


def polynomial_forward(factors, timestamp, degree, poly_base_factor=1.0,
                       *, prepared=None, force_pallas=False):
    """Forward pass of `Polynomial`.

    factors:   (P, max_degree, D) float32 (ignored if `prepared` is given)
    timestamp: (P, 1) float32
    degree:    static python int (ignored if `prepared` is given)
    prepared:  optional PreparedFactors from `prepare_factors()` (cached layout).
    """
    timestamp = jnp.asarray(timestamp, jnp.float32)
    if prepared is None:
        factors = jnp.asarray(factors, jnp.float32)
        P, F, D = factors.shape
        deg = max(0, min(int(degree), F))
        if deg == 0:
            return jnp.zeros((P, D), jnp.float32)
        if deg == 1:
            return factors[:, 0, :]                                  # x**0 == 1 always
        if not force_pallas and P * D < _PALLAS_MIN_ELEMS:
            return _forward_jnp(factors, timestamp, deg, poly_base_factor)
        prepared = prepare_factors(factors, deg)
    return _forward_pallas(prepared, timestamp, poly_base_factor)


# ----------------------------------------------------------------------------
# Reference & tests
# ----------------------------------------------------------------------------
def _reference(factors, timestamp, degree, poly_base_factor=1.0):
    factors = np.asarray(factors, np.float32)
    t = np.asarray(timestamp, np.float32).reshape(-1)
    P, F, D = factors.shape
    x = np.float32(poly_base_factor) * t
    out = np.zeros((P, D), np.float32)
    for f in range(min(int(degree), F)):
        w = np.ones((P,), np.float32) if f == 0 else (x ** f).astype(np.float32)
        out += factors[:, f, :] * w[:, None]
    return out


if __name__ == "__main__":
    key = jax.random.PRNGKey(0)
    k1, k2, k3, k4, k5 = jax.random.split(key, 5)

    MAX_DEGREE = 5

    # Case 1: canonical small shapes, forced through the Pallas path (exercises padding).
    P, D, degree = 16, 8, 3
    factors = jax.random.normal(k1, (P, MAX_DEGREE, D), dtype=jnp.float32)
    timestamp = jax.random.uniform(k2, (P, 1), dtype=jnp.float32, minval=-1.0, maxval=1.0)
    out = jax.block_until_ready(
        polynomial_forward(factors, timestamp, degree, force_pallas=True))
    np.testing.assert_allclose(np.asarray(out),
                               _reference(factors, timestamp, degree),
                               rtol=1e-5, atol=1e-5)

    # Case 2: non-aligned P*D (padding path), full degree, non-unit base factor.
    P2, D2, deg2, base2 = 37, 6, 5, 0.5
    factors2 = jax.random.normal(k3, (P2, MAX_DEGREE, D2), dtype=jnp.float32)
    timestamp2 = jax.random.uniform(k4, (P2, 1), dtype=jnp.float32, minval=-2.0, maxval=2.0)
    out2 = jax.block_until_ready(
        polynomial_forward(factors2, timestamp2, deg2, base2, force_pallas=True))
    np.testing.assert_allclose(np.asarray(out2),
                               _reference(factors2, timestamp2, deg2, base2),
                               rtol=1e-5, atol=1e-5)

    # Case 3: cached (prepared) factor layout reused across timesteps + multi-tile grid.
    P3, D3, deg3 = 2048, 32, 4
    factors3 = jax.random.normal(k5, (P3, MAX_DEGREE, D3), dtype=jnp.float32)
    prep3 = prepare_factors(factors3, deg3)            # re-layout once, reuse below
    for step in range(2):
        timestamp3 = jnp.full((P3, 1), 0.25 * (step + 1), jnp.float32)
        out3 = jax.block_until_ready(
            polynomial_forward(None, timestamp3, deg3, prepared=prep3))
        np.testing.assert_allclose(np.asarray(out3),
                                   _reference(factors3, timestamp3, deg3),
                                   rtol=1e-5, atol=1e-5)

    # Case 4: tiny-problem jnp fallback (no Pallas launch) matches too.
    out4 = jax.block_until_ready(polynomial_forward(factors, timestamp, degree))
    np.testing.assert_allclose(np.asarray(out4),
                               _reference(factors, timestamp, degree),
                               rtol=1e-5, atol=1e-5)

    print("KERNEL_OK")
</pallas_src>

<mosaic_0001>
module attributes {stable_mosaic.version = 11 : i64} {
  func.func @kernel(%arg0: i32, %arg1: memref<3x8x128xf32, #tpu.memory_space<vmem>>, %arg2: memref<8x128xf32, #tpu.memory_space<vmem>>, %arg3: memref<8x128xf32, #tpu.memory_space<vmem>>) attributes {dimension_semantics = [#tpu.dimension_semantics<parallel>], iteration_bounds = array<i64: 1>, scalar_prefetch = 0 : i64, scratch_operands = 0 : i64, tpu.core_type = #tpu.core_type<tc>, window_params = [{transform_indices = @transform_0, window_bounds = array<i64: 3, 8, 128>}, {transform_indices = @transform_1, window_bounds = array<i64: 8, 128>}, {transform_indices = @transform_2, window_bounds = array<i64: 8, 128>}]} {
    %c0 = arith.constant 0 : index
    %c0_0 = arith.constant 0 : index
    %0 = vector.load %arg2[%c0, %c0_0] : memref<8x128xf32, #tpu.memory_space<vmem>>, vector<8x128xf32>
    %c2 = arith.constant 2 : index
    %c0_1 = arith.constant 0 : index
    %c0_2 = arith.constant 0 : index
    %1 = vector.load %arg1[%c2, %c0_1, %c0_2] : memref<3x8x128xf32, #tpu.memory_space<vmem>>, vector<1x8x128xf32>
    %2 = vector.shape_cast %1 : vector<1x8x128xf32> to vector<8x128xf32>
    %3 = arith.mulf %2, %0 : vector<8x128xf32>
    %c1 = arith.constant 1 : index
    %c0_3 = arith.constant 0 : index
    %c0_4 = arith.constant 0 : index
    %4 = vector.load %arg1[%c1, %c0_3, %c0_4] : memref<3x8x128xf32, #tpu.memory_space<vmem>>, vector<1x8x128xf32>
    %5 = vector.shape_cast %4 : vector<1x8x128xf32> to vector<8x128xf32>
    %6 = arith.addf %3, %5 : vector<8x128xf32>
    %7 = arith.mulf %6, %0 : vector<8x128xf32>
    %c0_5 = arith.constant 0 : index
    %c0_6 = arith.constant 0 : index
    %c0_7 = arith.constant 0 : index
    %8 = vector.load %arg1[%c0_5, %c0_6, %c0_7] : memref<3x8x128xf32, #tpu.memory_space<vmem>>, vector<1x8x128xf32>
    %9 = vector.shape_cast %8 : vector<1x8x128xf32> to vector<8x128xf32>
    %10 = arith.addf %7, %9 : vector<8x128xf32>
    %c0_8 = arith.constant 0 : index
    %c0_9 = arith.constant 0 : index
    %11 = vector.load %arg3[%c0_8, %c0_9] : memref<8x128xf32, #tpu.memory_space<vmem>>, vector<8x128xf32>
    tpu.vector_store %arg3[%c0_8, %c0_9], %10 {strides = array<i32>} : memref<8x128xf32, #tpu.memory_space<vmem>>, vector<8x128xf32>,
    return
  }
  func.func @transform_0(%arg0: i32) -> (i32, i32, i32) {
    %c0_i32 = arith.constant 0 : i32
    %c0_i32_0 = arith.constant 0 : i32
    %c0_i32_1 = arith.constant 0 : i32
    return %c0_i32, %arg0, %c0_i32_0 : i32, i32, i32
  }
  func.func @transform_1(%arg0: i32) -> (i32, i32) {
    %c0_i32 = arith.constant 0 : i32
    %c0_i32_0 = arith.constant 0 : i32
    return %arg0, %c0_i32 : i32, i32
  }
  func.func @transform_2(%arg0: i32) -> (i32, i32) {
    %c0_i32 = arith.constant 0 : i32
    %c0_i32_0 = arith.constant 0 : i32
    return %arg0, %c0_i32 : i32, i32
  }
}

</mosaic_0001>

<llo_original>
// kernel: tpu_custom_call.1
$region0: #{tpu_custom_call.1}
  #allocation0 [shape = 'u32[]', space=smem, size = 0x4, offset = 0x4, fixed_abs, tag = 'smem constant byte address 0x4 - core index']
  #allocation1 [shape = 'u32[144,128]{1,0:T(1,128)}', space=vmem, size = 0x12000, scoped, tag = 'internal scratch']
  %s0 = inlined_call_operand.hbm [shape: f32[3,8,128], index: 0, kind: input, shape index: {}]
  %s1 = inlined_call_operand.hbm [shape: f32[8,128], index: 1, kind: input, shape index: {}]
  %s2 = inlined_call_operand.hbm [shape: f32[8,128], index: 2, kind: output, shape index: {}]
  %s3 = sld [smem:[#allocation0]]
  $region26: #{tpu_custom_call.1} parent=0
    _
  %s5 = ssub.s32 1, %s3
  %s6 = scalar_select 0, %s5, %s3
  $region1: #{tpu_custom_call.1} parent=0
    #allocation2 [shape = 'u8[12288]{0}', space=vmem, size = 0x3000, scoped, tag = 'input window, operand 0, single buffered']
    #allocation3 [shape = 's32[1]{0}', space=sflag, size = 0x4, scoped, tag = 'scoped memory for tpu_custom_call.1']
    #allocation4 [shape = 's32[1]{0}', space=sflag, size = 0x4, scoped, tag = 'scoped memory for tpu_custom_call.1']
    #allocation5 [shape = 'u8[4096]{0}', space=vmem, size = 0x1000, scoped, tag = 'input window, operand 1, single buffered']
    #allocation6 [shape = 's32[1]{0}', space=sflag, size = 0x4, scoped, tag = 'scoped memory for tpu_custom_call.1']
    #allocation7 [shape = 'u8[4096]{0}', space=vmem, size = 0x1000, scoped, tag = 'output window, operand 0, single buffered']
    %7 = vsyncpa [#allocation3], 0
    %8 = vsyncpa [#allocation6], 0
    %9 = vsyncpa [#allocation4], 0
    // Predicated region
    $region2: #{tpu_custom_call.1} parent=1 // pred_check
      _
    $region3: #{tpu_custom_call.1} parent=1 // pred_check_branch
      %11 = sbr.rel (0) target = $region5
    $region4: #{tpu_custom_call.1} parent=1 // pred_region
      %s13 = ssub.s32 384, 384
      %14 = vsyncadd [#allocation3], %s13
      %s15 = sshll.u32 [#allocation2], 4
      %s16 = int_to_ptr.vmem [resolvable:$true] %s15
      %21 = dma.hbm_to_vmem [thread:$0]  %s0, 384, %s16, [#allocation3], 128, 128, 8
    $region5: #{tpu_custom_call.1} parent=1 // pred_fallthru
      _
    // Predicated region
    $region6: #{tpu_custom_call.1} parent=1 // pred_check
      _
    $region7: #{tpu_custom_call.1} parent=1 // pred_check_branch
      %23 = sbr.rel (0) target = $region9
    $region8: #{tpu_custom_call.1} parent=1 // pred_region
      %s25 = ssub.s32 128, 128
      %26 = vsyncadd [#allocation6], %s25
      %s28 = sshll.u32 [#allocation5], 4
      %s29 = int_to_ptr.vmem [resolvable:$true] %s28
      %31 = dma.hbm_to_vmem [thread:$0]  %s1, 128, %s29, [#allocation6]
    $region9: #{tpu_custom_call.1} parent=1 // pred_fallthru
      _
    // Predicated region
    $region10: #{tpu_custom_call.1} parent=1 // pred_check
      _
    $region11: #{tpu_custom_call.1} parent=1 // pred_check_branch
      %33 = sbr.rel (0) target = $region13
    $region12: #{tpu_custom_call.1} parent=1 // pred_region
      %34 = dma.done [#allocation3], 384
    $region13: #{tpu_custom_call.1} parent=1 // pred_fallthru
      _
    // Predicated region
    $region14: #{tpu_custom_call.1} parent=1 // pred_check
      _
    $region15: #{tpu_custom_call.1} parent=1 // pred_check_branch
      %36 = sbr.rel (0) target = $region17
    $region16: #{tpu_custom_call.1} parent=1 // pred_region
      %37 = dma.done [#allocation6], 128
    $region17: #{tpu_custom_call.1} parent=1 // pred_fallthru
      _
    %v38 = vld [vmem:[#allocation5] sm:$0xff]
    %s39 = scalar_lea.vmem [#allocation2], 16
    %v40 = vld [vmem:[%s39] sm:$0xff]
    %v41 = vmul.f32 %v40, %v38
    %s42 = scalar_lea.vmem [#allocation2], 8
    %v43 = vld [vmem:[%s42] sm:$0xff]
    %v44 = vadd.f32 %v41, %v43
    %v45 = vmul.f32 %v44, %v38
    %v46 = vld [vmem:[#allocation2] sm:$0xff]
    %v47 = vadd.f32 %v45, %v46
    %48 = vst [vmem:[#allocation7] sm:$0xff] %v47
    // Predicated region
    $region18: #{tpu_custom_call.1} parent=1 // pred_check
      _
    $region19: #{tpu_custom_call.1} parent=1 // pred_check_branch
      %50 = sbr.rel (0) target = $region21
    $region20: #{tpu_custom_call.1} parent=1 // pred_region
      %s52 = ssub.s32 128, 128
      %53 = vsyncadd [#allocation4], %s52
      %s55 = sshll.u32 [#allocation7], 4
      %s56 = int_to_ptr.vmem [resolvable:$true] %s55
      %58 = dma.vmem_to_hbm [thread:$0]  %s56, 128, %s2, [#allocation4]
    $region21: #{tpu_custom_call.1} parent=1 // pred_fallthru
      _
    // Predicated region
    $region22: #{tpu_custom_call.1} parent=1 // pred_check
      _
    $region23: #{tpu_custom_call.1} parent=1 // pred_check_branch
      %60 = sbr.rel (0) target = $region25
    $region24: #{tpu_custom_call.1} parent=1 // pred_region
      %61 = dma.done [#allocation4], 128
    $region25: #{tpu_custom_call.1} parent=1 // pred_fallthru
      _
    %62 = vsyncpa [#allocation3], 1
    %63 = vsyncpa [#allocation6], 1
    %64 = vsyncpa [#allocation4], 1

</llo_original>
